<compile_context>
chip_gen: v7x
topology: tpu7x:2x2x1
jax: 0.10.0
libtpu: 0.0.40
codegen_flags: <defaults>
</compile_context>

<pallas_src>
import jax
import jax.numpy as jnp
import numpy as np
from jax.experimental import pallas as pl
from jax.experimental.pallas import tpu as pltpu


# ---------------------------------------------------------------------------
# Fused Pallas kernel: entire CNN_3 forward for a whole batch chunk
# ---------------------------------------------------------------------------

def _cnn3_fused_kernel(x_ref,                      # (Bc, C*L)       channel-major flat
                       m1_ref, s1_ref,             # (C*L1, 2*F1*L1h), (1, F1*L1h)
                       m2_ref, s2_ref,             # (F1*L2, 2*F2*L2h), (1, F2*L2h)
                       m3_ref, s3_ref,             # (F2*L3, F3*L3),   (1, F3*L3)
                       fw1_ref, fb1_ref,           # (F3*L3, n_fc),    (1, n_fc)
                       fw2_ref, fb2_ref,           # (n_fc, n_out),    (1, n_out)
                       out_ref):                   # (Bc, n_out)

    def leaky(q):                                  # LeakyReLU(0.01) — PyTorch default
        return jnp.where(q >= 0.0, q, 0.01 * q)

    def conv_bn_pool(h, m_ref, s_ref):
        # h: (B, Cin*Lin).  m_ref columns = [even phase | odd phase], each ordered
        # (filter-major, position-minor); BN scale + replicate padding folded in.
        g = jnp.dot(h, m_ref[...], preferred_element_type=jnp.float32)
        half = g.shape[1] // 2
        # MaxPool(2,2) = max over the two phases; shift + LeakyReLU commute with it.
        return leaky(jnp.maximum(g[:, :half], g[:, half:]) + s_ref[...])

    def conv_bn(h, m_ref, s_ref):
        g = jnp.dot(h, m_ref[...], preferred_element_type=jnp.float32)
        return leaky(g + s_ref[...])

    h = x_ref[...].astype(jnp.float32)             # (B, C*L)
    h = conv_bn_pool(h, m1_ref, s1_ref)            # cnn_layer1 (+Dropout = id)
    h = conv_bn_pool(h, m2_ref, s2_ref)            # cnn_layer2 (+Dropout = id)
    h = conv_bn(h, m3_ref, s3_ref)                 # cnn_layer3 (+Dropout = id)
    # h already equals torch.flatten(x, 1) (channel-major) -> fc_out = two matmuls.
    z = jnp.dot(h, fw1_ref[...], preferred_element_type=jnp.float32) + fb1_ref[...]
    out_ref[...] = (jnp.dot(z, fw2_ref[...], preferred_element_type=jnp.float32)
                    + fb2_ref[...])


# ---------------------------------------------------------------------------
# One-time parameter preparation (host-side, outside the traced forward)
# ---------------------------------------------------------------------------

def _conv_bn_as_matrix(w_np, scale_np, Lin, pool):
    """Fold Conv1d(replicate pad, stride 1) + BN scale (+ optional MaxPool phases)
    into one dense matrix acting on a channel-major-flattened input.

    Column order: pooled  -> index (phase*F + f)*Lout + m, phase in {even, odd}
                  no pool -> index f*Lout + m
    """
    F, Cin, K = w_np.shape
    pad = K // 2
    Lout = Lin // 2 if pool else Lin
    n_phase = 2 if pool else 1
    M = np.zeros((Cin * Lin, n_phase * F * Lout), dtype=np.float64)
    for phase in range(n_phase):
        for f in range(F):
            for m in range(Lout):
                col = (phase * F + f) * Lout + m
                pos = 2 * m + phase if pool else m
                for k in range(K):
                    src = min(max(pos + k - pad, 0), Lin - 1)   # replicate padding
                    for c in range(Cin):
                        M[c * Lin + src, col] += w_np[f, c, k] * scale_np[f]
    return jnp.asarray(M, dtype=jnp.float32), Lout


def prepare_params(params, length_ts, eps=1e-5):
    """Fold eval-mode BatchNorm + conv bias and pre-build all dense layer matrices."""
    prep = {}
    Lin = length_ts
    for idx, (name, pool) in enumerate((("c1", True), ("c2", True), ("c3", False)), 1):
        p = params[name]
        w = np.asarray(p["w"], dtype=np.float64)                 # (F, Cin, K)
        F, _, K = w.shape
        assert K % 2 == 1, "padding=K//2 only preserves length for odd kernel sizes"
        if pool:
            assert Lin % 2 == 0, "length must be divisible by 2 per pooled layer"
        scale = np.asarray(p["gamma"], np.float64) / np.sqrt(
            np.asarray(p["var"], np.float64) + eps)
        shift = ((np.asarray(p["b"], np.float64) - np.asarray(p["mean"], np.float64))
                 * scale + np.asarray(p["beta"], np.float64))
        M, Lout = _conv_bn_as_matrix(w, scale, Lin, pool)
        prep[f"m{idx}"] = M
        prep[f"s{idx}"] = jnp.asarray(np.repeat(shift, Lout)[None, :], jnp.float32)
        Lin = Lout

    pf = params["fc"]
    n_fc, D = pf["w1"].shape
    n_out = pf["w2"].shape[0]
    assert D == params["c3"]["w"].shape[0] * Lin, "fc1 in_features mismatch"
    prep["w1"] = jnp.transpose(pf["w1"]).astype(jnp.float32)     # (D, n_fc)
    prep["b1"] = pf["b1"].reshape(1, n_fc).astype(jnp.float32)
    prep["w2"] = jnp.transpose(pf["w2"]).astype(jnp.float32)     # (n_fc, n_out)
    prep["b2"] = pf["b2"].reshape(1, n_out).astype(jnp.float32)
    return prep


# ---------------------------------------------------------------------------
# Forward: a single pallas_call, whole batch (or a few chunks) per grid step
# ---------------------------------------------------------------------------

def cnn3_forward(x_ncl, prep, *, batch_chunks=1):
    """x_ncl: (B, input_channels, length_ts) — same NCL layout as the PyTorch module."""
    B, C, L = x_ncl.shape
    x2 = x_ncl.reshape(B, C * L)                   # channel-major flatten: free view
    n_out = prep["b2"].shape[1]

    # Optional megacore chunking (v7x): only if chunks keep sublane-aligned full blocks.
    if batch_chunks > 1 and (B % batch_chunks != 0 or (B // batch_chunks) % 8 != 0):
        batch_chunks = 1
    Bc = B // batch_chunks

    consts = (prep["m1"], prep["s1"], prep["m2"], prep["s2"], prep["m3"], prep["s3"],
              prep["w1"], prep["b1"], prep["w2"], prep["b2"])

    def const_spec(a):
        return pl.BlockSpec(a.shape, lambda i: (0, 0))

    y = pl.pallas_call(
        _cnn3_fused_kernel,
        out_shape=jax.ShapeDtypeStruct((B, n_out), jnp.float32),
        grid=(batch_chunks,),
        in_specs=[pl.BlockSpec((Bc, C * L), lambda i: (i, 0))]
                 + [const_spec(a) for a in consts],
        out_specs=pl.BlockSpec((Bc, n_out), lambda i: (i, 0)),
        compiler_params=pltpu.CompilerParams(
            dimension_semantics=("parallel",),
            vmem_limit_bytes=32 * 1024 * 1024),    # safe on v5e/v6e/v7x; workload is KiB
    )(x2, *consts)
    return y


# ---------------------------------------------------------------------------
# Pure-JAX reference (same math, no Pallas) for the correctness check
# ---------------------------------------------------------------------------

def cnn3_forward_ref(x_ncl, params, eps=1e-5):
    def conv_layer(x, p):
        B, L, C = x.shape
        F, _, K = p["w"].shape
        pad = K // 2
        xp = jnp.pad(x, ((0, 0), (pad, pad), (0, 0)), mode="edge")     # replicate pad
        patches = jnp.stack([xp[:, i:i + L, :] for i in range(K)], axis=2)
        patches = patches.reshape(B * L, K * C)
        w = jnp.transpose(p["w"], (2, 1, 0)).reshape(K * C, F)
        y = patches @ w + p["b"][None, :]
        y = (y - p["mean"][None, :]) / jnp.sqrt(p["var"][None, :] + eps)
        y = y * p["gamma"][None, :] + p["beta"][None, :]
        y = jnp.where(y >= 0.0, y, 0.01 * y)
        return y.reshape(B, L, F)

    def pool(x):
        B, L, C = x.shape
        return jnp.max(x.reshape(B, L // 2, 2, C), axis=2)

    x = jnp.transpose(x_ncl, (0, 2, 1))
    x = pool(conv_layer(x, params["c1"]))
    x = pool(conv_layer(x, params["c2"]))
    x = conv_layer(x, params["c3"])
    B, Lb, F3 = x.shape
    x = jnp.transpose(x, (0, 2, 1)).reshape(B, F3 * Lb)    # channel-major flatten
    pf = params["fc"]
    h = x @ pf["w1"].T + pf["b1"][None, :]
    return h @ pf["w2"].T + pf["b2"][None, :]


# ---------------------------------------------------------------------------
# Deterministic parameter init (PyTorch default-style uniform bounds)
# ---------------------------------------------------------------------------

def init_params(key, input_channels, n_f1, k1, n_f2, k2, n_f3, k3,
                bottleneck_length, n_fc, n_outputs):
    def conv_params(key, F, C, K):
        k_w, k_b = jax.random.split(key)
        bound = 1.0 / np.sqrt(C * K)
        return {
            "w": jax.random.uniform(k_w, (F, C, K), jnp.float32, -bound, bound),
            "b": jax.random.uniform(k_b, (F,), jnp.float32, -bound, bound),
            # BatchNorm1d defaults (eval mode)
            "gamma": jnp.ones((F,), jnp.float32),
            "beta": jnp.zeros((F,), jnp.float32),
            "mean": jnp.zeros((F,), jnp.float32),
            "var": jnp.ones((F,), jnp.float32),
        }

    def linear_params(key, out_f, in_f):
        k_w, k_b = jax.random.split(key)
        bound = 1.0 / np.sqrt(in_f)
        return (jax.random.uniform(k_w, (out_f, in_f), jnp.float32, -bound, bound),
                jax.random.uniform(k_b, (out_f,), jnp.float32, -bound, bound))

    keys = jax.random.split(key, 5)
    w1, b1 = linear_params(keys[3], n_fc, bottleneck_length * n_f3)
    w2, b2 = linear_params(keys[4], n_outputs, n_fc)
    return {
        "c1": conv_params(keys[0], n_f1, input_channels, k1),
        "c2": conv_params(keys[1], n_f2, n_f1, k2),
        "c3": conv_params(keys[2], n_f3, n_f2, k3),
        "fc": {"w1": w1, "b1": b1, "w2": w2, "b2": b2},
    }


# ---------------------------------------------------------------------------

if __name__ == "__main__":
    batch = 2
    input_channels = 4
    length_ts = 16
    n_filters_c1, size_filters_c1 = 8, 3
    n_filters_c2, size_filters_c2 = 8, 3
    n_filters_c3, size_filters_c3 = 8, 3
    n_fc = 32
    n_outputs = 3
    bottleneck_length = length_ts // 2 ** 2

    key = jax.random.PRNGKey(0)
    k_params, k_x = jax.random.split(key)
    params = init_params(k_params, input_channels,
                         n_filters_c1, size_filters_c1,
                         n_filters_c2, size_filters_c2,
                         n_filters_c3, size_filters_c3,
                         bottleneck_length, n_fc, n_outputs)
    x = jax.random.normal(k_x, (batch, input_channels, length_ts), dtype=jnp.float32)

    # One-time BN fold + dense layer-matrix construction (outside the traced forward).
    prep = prepare_params(params, length_ts)

    # TODO(synk): training-mode Dropout and BatchNorm running-stat updates are not
    # implemented; inference semantics (identity dropout, running stats) are used.

    out = jax.jit(cnn3_forward)(x, prep)
    out = jax.block_until_ready(out)

    ref = cnn3_forward_ref(x, params)
    assert out.shape == (batch, n_outputs)
    np.testing.assert_allclose(np.asarray(out), np.asarray(ref), rtol=1e-4, atol=1e-4)

    print("KERNEL_OK")
</pallas_src>

<mosaic_0001>
module attributes {stable_mosaic.version = 11 : i64} {
  func.func @_cnn3_fused_kernel(%arg0: i32, %arg1: memref<2x64xf32, #tpu.memory_space<vmem>>, %arg2: memref<64x128xf32, #tpu.memory_space<vmem>>, %arg3: memref<1x64xf32, #tpu.memory_space<vmem>>, %arg4: memref<64x64xf32, #tpu.memory_space<vmem>>, %arg5: memref<1x32xf32, #tpu.memory_space<vmem>>, %arg6: memref<32x32xf32, #tpu.memory_space<vmem>>, %arg7: memref<1x32xf32, #tpu.memory_space<vmem>>, %arg8: memref<32x32xf32, #tpu.memory_space<vmem>>, %arg9: memref<1x32xf32, #tpu.memory_space<vmem>>, %arg10: memref<32x3xf32, #tpu.memory_space<vmem>>, %arg11: memref<1x3xf32, #tpu.memory_space<vmem>>, %arg12: memref<2x3xf32, #tpu.memory_space<vmem>>) attributes {dimension_semantics = [#tpu.dimension_semantics<parallel>], iteration_bounds = array<i64: 1>, scalar_prefetch = 0 : i64, scratch_operands = 0 : i64, tpu.core_type = #tpu.core_type<tc>, window_params = [{transform_indices = @transform_0, window_bounds = array<i64: 2, 64>}, {pipeline_mode = #tpu.pipeline_mode<synchronous>, transform_indices = @transform_1, window_bounds = array<i64: 64, 128>}, {pipeline_mode = #tpu.pipeline_mode<synchronous>, transform_indices = @transform_2, window_bounds = array<i64: 1, 64>}, {pipeline_mode = #tpu.pipeline_mode<synchronous>, transform_indices = @transform_3, window_bounds = array<i64: 64, 64>}, {pipeline_mode = #tpu.pipeline_mode<synchronous>, transform_indices = @transform_4, window_bounds = array<i64: 1, 32>}, {pipeline_mode = #tpu.pipeline_mode<synchronous>, transform_indices = @transform_5, window_bounds = array<i64: 32, 32>}, {pipeline_mode = #tpu.pipeline_mode<synchronous>, transform_indices = @transform_6, window_bounds = array<i64: 1, 32>}, {pipeline_mode = #tpu.pipeline_mode<synchronous>, transform_indices = @transform_7, window_bounds = array<i64: 32, 32>}, {pipeline_mode = #tpu.pipeline_mode<synchronous>, transform_indices = @transform_8, window_bounds = array<i64: 1, 32>}, {pipeline_mode = #tpu.pipeline_mode<synchronous>, transform_indices = @transform_9, window_bounds = array<i64: 32, 3>}, {pipeline_mode = #tpu.pipeline_mode<synchronous>, transform_indices = @transform_10, window_bounds = array<i64: 1, 3>}, {transform_indices = @transform_11, window_bounds = array<i64: 2, 3>}]} {
    %c0 = arith.constant 0 : index
    %c0_0 = arith.constant 0 : index
    %0 = vector.load %arg1[%c0, %c0_0] : memref<2x64xf32, #tpu.memory_space<vmem>>, vector<2x64xf32>
    %c0_1 = arith.constant 0 : index
    %c0_2 = arith.constant 0 : index
    %1 = vector.load %arg2[%c0_1, %c0_2] : memref<64x128xf32, #tpu.memory_space<vmem>>, vector<64x128xf32>
    %cst = arith.constant dense<0.000000e+00> : vector<2x128xf32>
    %2 = tpu.matmul %0, %1, %cst {dimension_numbers = #tpu.dot_dimension_numbers<[1], [0], [0], [1], [0, 0, 1, 1], [], []>} : vector<2x64xf32>, vector<64x128xf32>, vector<2x128xf32> -> vector<2x128xf32>
    %3 = vector.extract_strided_slice %2 {offsets = [0, 0], sizes = [2, 64], strides = [1, 1]} : vector<2x128xf32> to vector<2x64xf32>
    %4 = vector.extract_strided_slice %2 {offsets = [0, 64], sizes = [2, 64], strides = [1, 1]} : vector<2x128xf32> to vector<2x64xf32>
    %5 = arith.maximumf %3, %4 : vector<2x64xf32>
    %c0_3 = arith.constant 0 : index
    %c0_4 = arith.constant 0 : index
    %6 = vector.load %arg3[%c0_3, %c0_4] : memref<1x64xf32, #tpu.memory_space<vmem>>, vector<1x64xf32>
    %7 = vector.broadcast %6 : vector<1x64xf32> to vector<2x64xf32>
    %8 = arith.addf %5, %7 : vector<2x64xf32>
    %cst_5 = arith.constant 0.000000e+00 : f32
    %9 = vector.broadcast %cst_5 : f32 to vector<2x64xf32>
    %10 = arith.cmpf oge, %8, %9 : vector<2x64xf32>
    %cst_6 = arith.constant 0.00999999977 : f32
    %11 = vector.broadcast %cst_6 : f32 to vector<2x64xf32>
    %12 = arith.mulf %11, %8 : vector<2x64xf32>
    %13 = arith.select %10, %8, %12 : vector<2x64xi1>, vector<2x64xf32>
    %c0_7 = arith.constant 0 : index
    %c0_8 = arith.constant 0 : index
    %14 = vector.load %arg4[%c0_7, %c0_8] : memref<64x64xf32, #tpu.memory_space<vmem>>, vector<64x64xf32>
    %cst_9 = arith.constant dense<0.000000e+00> : vector<2x64xf32>
    %15 = tpu.matmul %13, %14, %cst_9 {dimension_numbers = #tpu.dot_dimension_numbers<[1], [0], [0], [1], [0, 0, 1, 1], [], []>} : vector<2x64xf32>, vector<64x64xf32>, vector<2x64xf32> -> vector<2x64xf32>
    %16 = vector.extract_strided_slice %15 {offsets = [0, 0], sizes = [2, 32], strides = [1, 1]} : vector<2x64xf32> to vector<2x32xf32>
    %17 = vector.extract_strided_slice %15 {offsets = [0, 32], sizes = [2, 32], strides = [1, 1]} : vector<2x64xf32> to vector<2x32xf32>
    %18 = arith.maximumf %16, %17 : vector<2x32xf32>
    %c0_10 = arith.constant 0 : index
    %c0_11 = arith.constant 0 : index
    %19 = vector.load %arg5[%c0_10, %c0_11] : memref<1x32xf32, #tpu.memory_space<vmem>>, vector<1x32xf32>
    %20 = vector.broadcast %19 : vector<1x32xf32> to vector<2x32xf32>
    %21 = arith.addf %18, %20 : vector<2x32xf32>
    %cst_12 = arith.constant 0.000000e+00 : f32
    %22 = vector.broadcast %cst_12 : f32 to vector<2x32xf32>
    %23 = arith.cmpf oge, %21, %22 : vector<2x32xf32>
    %cst_13 = arith.constant 0.00999999977 : f32
    %24 = vector.broadcast %cst_13 : f32 to vector<2x32xf32>
    %25 = arith.mulf %24, %21 : vector<2x32xf32>
    %26 = arith.select %23, %21, %25 : vector<2x32xi1>, vector<2x32xf32>
    %c0_14 = arith.constant 0 : index
    %c0_15 = arith.constant 0 : index
    %27 = vector.load %arg6[%c0_14, %c0_15] : memref<32x32xf32, #tpu.memory_space<vmem>>, vector<32x32xf32>
    %cst_16 = arith.constant dense<0.000000e+00> : vector<2x32xf32>
    %28 = tpu.matmul %26, %27, %cst_16 {dimension_numbers = #tpu.dot_dimension_numbers<[1], [0], [0], [1], [0, 0, 1, 1], [], []>} : vector<2x32xf32>, vector<32x32xf32>, vector<2x32xf32> -> vector<2x32xf32>
    %c0_17 = arith.constant 0 : index
    %c0_18 = arith.constant 0 : index
    %29 = vector.load %arg7[%c0_17, %c0_18] : memref<1x32xf32, #tpu.memory_space<vmem>>, vector<1x32xf32>
    %30 = vector.broadcast %29 : vector<1x32xf32> to vector<2x32xf32>
    %31 = arith.addf %28, %30 : vector<2x32xf32>
    %cst_19 = arith.constant 0.000000e+00 : f32
    %32 = vector.broadcast %cst_19 : f32 to vector<2x32xf32>
    %33 = arith.cmpf oge, %31, %32 : vector<2x32xf32>
    %cst_20 = arith.constant 0.00999999977 : f32
    %34 = vector.broadcast %cst_20 : f32 to vector<2x32xf32>
    %35 = arith.mulf %34, %31 : vector<2x32xf32>
    %36 = arith.select %33, %31, %35 : vector<2x32xi1>, vector<2x32xf32>
    %c0_21 = arith.constant 0 : index
    %c0_22 = arith.constant 0 : index
    %37 = vector.load %arg8[%c0_21, %c0_22] : memref<32x32xf32, #tpu.memory_space<vmem>>, vector<32x32xf32>
    %cst_23 = arith.constant dense<0.000000e+00> : vector<2x32xf32>
    %38 = tpu.matmul %36, %37, %cst_23 {dimension_numbers = #tpu.dot_dimension_numbers<[1], [0], [0], [1], [0, 0, 1, 1], [], []>} : vector<2x32xf32>, vector<32x32xf32>, vector<2x32xf32> -> vector<2x32xf32>
    %c0_24 = arith.constant 0 : index
    %c0_25 = arith.constant 0 : index
    %39 = vector.load %arg9[%c0_24, %c0_25] : memref<1x32xf32, #tpu.memory_space<vmem>>, vector<1x32xf32>
    %40 = vector.broadcast %39 : vector<1x32xf32> to vector<2x32xf32>
    %41 = arith.addf %38, %40 : vector<2x32xf32>
    %c0_26 = arith.constant 0 : index
    %c0_27 = arith.constant 0 : index
    %42 = vector.load %arg10[%c0_26, %c0_27] : memref<32x3xf32, #tpu.memory_space<vmem>>, vector<32x3xf32>
    %cst_28 = arith.constant dense<0.000000e+00> : vector<2x3xf32>
    %43 = tpu.matmul %41, %42, %cst_28 {dimension_numbers = #tpu.dot_dimension_numbers<[1], [0], [0], [1], [0, 0, 1, 1], [], []>} : vector<2x32xf32>, vector<32x3xf32>, vector<2x3xf32> -> vector<2x3xf32>
    %c0_29 = arith.constant 0 : index
    %c0_30 = arith.constant 0 : index
    %44 = vector.load %arg11[%c0_29, %c0_30] : memref<1x3xf32, #tpu.memory_space<vmem>>, vector<1x3xf32>
    %45 = vector.broadcast %44 : vector<1x3xf32> to vector<2x3xf32>
    %46 = arith.addf %43, %45 : vector<2x3xf32>
    %c0_31 = arith.constant 0 : index
    %c0_32 = arith.constant 0 : index
    %47 = vector.load %arg12[%c0_31, %c0_32] : memref<2x3xf32, #tpu.memory_space<vmem>>, vector<2x3xf32>
    tpu.vector_store %arg12[%c0_31, %c0_32], %46 {strides = array<i32>} : memref<2x3xf32, #tpu.memory_space<vmem>>, vector<2x3xf32>,
    return
  }
  func.func @transform_0(%arg0: i32) -> (i32, i32) {
    %c0_i32 = arith.constant 0 : i32
    %c0_i32_0 = arith.constant 0 : i32
    return %arg0, %c0_i32 : i32, i32
  }
  func.func @transform_1(%arg0: i32) -> (i32, i32) {
    %c0_i32 = arith.constant 0 : i32
    %c0_i32_0 = arith.constant 0 : i32
    %c0_i32_1 = arith.constant 0 : i32
    return %c0_i32, %c0_i32_0 : i32, i32
  }
  func.func @transform_2(%arg0: i32) -> (i32, i32) {
    %c0_i32 = arith.constant 0 : i32
    %c0_i32_0 = arith.constant 0 : i32
    %c0_i32_1 = arith.constant 0 : i32
    return %c0_i32, %c0_i32_0 : i32, i32
  }
  func.func @transform_3(%arg0: i32) -> (i32, i32) {
    %c0_i32 = arith.constant 0 : i32
    %c0_i32_0 = arith.constant 0 : i32
    %c0_i32_1 = arith.constant 0 : i32
    return %c0_i32, %c0_i32_0 : i32, i32
  }
  func.func @transform_4(%arg0: i32) -> (i32, i32) {
    %c0_i32 = arith.constant 0 : i32
    %c0_i32_0 = arith.constant 0 : i32
    %c0_i32_1 = arith.constant 0 : i32
    return %c0_i32, %c0_i32_0 : i32, i32
  }
  func.func @transform_5(%arg0: i32) -> (i32, i32) {
    %c0_i32 = arith.constant 0 : i32
    %c0_i32_0 = arith.constant 0 : i32
    %c0_i32_1 = arith.constant 0 : i32
    return %c0_i32, %c0_i32_0 : i32, i32
  }
  func.func @transform_6(%arg0: i32) -> (i32, i32) {
    %c0_i32 = arith.constant 0 : i32
    %c0_i32_0 = arith.constant 0 : i32
    %c0_i32_1 = arith.constant 0 : i32
    return %c0_i32, %c0_i32_0 : i32, i32
  }
  func.func @transform_7(%arg0: i32) -> (i32, i32) {
    %c0_i32 = arith.constant 0 : i32
    %c0_i32_0 = arith.constant 0 : i32
    %c0_i32_1 = arith.constant 0 : i32
    return %c0_i32, %c0_i32_0 : i32, i32
  }
  func.func @transform_8(%arg0: i32) -> (i32, i32) {
    %c0_i32 = arith.constant 0 : i32
    %c0_i32_0 = arith.constant 0 : i32
    %c0_i32_1 = arith.constant 0 : i32
    return %c0_i32, %c0_i32_0 : i32, i32
  }
  func.func @transform_9(%arg0: i32) -> (i32, i32) {
    %c0_i32 = arith.constant 0 : i32
    %c0_i32_0 = arith.constant 0 : i32
    %c0_i32_1 = arith.constant 0 : i32
    return %c0_i32, %c0_i32_0 : i32, i32
  }
  func.func @transform_10(%arg0: i32) -> (i32, i32) {
    %c0_i32 = arith.constant 0 : i32
    %c0_i32_0 = arith.constant 0 : i32
    %c0_i32_1 = arith.constant 0 : i32
    return %c0_i32, %c0_i32_0 : i32, i32
  }
  func.func @transform_11(%arg0: i32) -> (i32, i32) {
    %c0_i32 = arith.constant 0 : i32
    %c0_i32_0 = arith.constant 0 : i32
    return %arg0, %c0_i32 : i32, i32
  }
}

</mosaic_0001>

<llo_original>
// kernel: cnn3_forward.1
$region0: #{cnn3_forward.1}
  #allocation0 [shape = 'u32[]', space=smem, size = 0x4, offset = 0x4, fixed_abs, tag = 'smem constant byte address 0x4 - core index']
  #allocation1 [shape = 'u32[144,128]{1,0:T(1,128)}', space=vmem, size = 0x12000, scoped, tag = 'internal scratch']
  %s0 = inlined_call_operand.vmem [shape: f32[2,64], index: 0, kind: input, shape index: {}]
  %s1 = inlined_call_operand.hbm [shape: f32[64,128], index: 1, kind: input, shape index: {}]
  %s2 = inlined_call_operand.hbm [shape: f32[1,64], index: 2, kind: input, shape index: {}]
  %s3 = inlined_call_operand.hbm [shape: f32[64,64], index: 3, kind: input, shape index: {}]
  %s4 = inlined_call_operand.vmem [shape: f32[1,32], index: 4, kind: input, shape index: {}]
  %s5 = inlined_call_operand.vmem [shape: f32[32,32], index: 5, kind: input, shape index: {}]
  %s6 = inlined_call_operand.vmem [shape: f32[1,32], index: 6, kind: input, shape index: {}]
  %s7 = inlined_call_operand.vmem [shape: f32[32,32], index: 7, kind: input, shape index: {}]
  %s8 = inlined_call_operand.hbm [shape: f32[1,32], index: 8, kind: input, shape index: {}]
  %s9 = inlined_call_operand.vmem [shape: f32[32,3], index: 9, kind: input, shape index: {}]
  %s10 = inlined_call_operand.hbm [shape: f32[1,3], index: 10, kind: input, shape index: {}]
  %s11 = inlined_call_operand.hbm [shape: f32[2,3], index: 11, kind: output, shape index: {}]
  %s12 = sld [smem:[#allocation0]]
  $region74: #{cnn3_forward.1} parent=0
    _
  %s14 = ssub.s32 1, %s12
  %s15 = scalar_select 0, %s14, %s12
  $region1: #{cnn3_forward.1} parent=0
    #allocation2 [shape = 'u8[32768]{0}', space=vmem, size = 0x8000, scoped, tag = 'input window, operand 1, single buffered']
    #allocation3 [shape = 's32[1]{0}', space=sflag, size = 0x4, scoped, tag = 'scoped memory for cnn3_forward.1']
    #allocation4 [shape = 's32[1]{0}', space=sflag, size = 0x4, scoped, tag = 'scoped memory for cnn3_forward.1']
    #allocation5 [shape = 'u8[512]{0}', space=vmem, size = 0x400, scoped, tag = 'input window, operand 2, single buffered']
    #allocation6 [shape = 's32[1]{0}', space=sflag, size = 0x4, scoped, tag = 'scoped memory for cnn3_forward.1']
    #allocation7 [shape = 'u8[32768]{0}', space=vmem, size = 0x8000, scoped, tag = 'input window, operand 3, single buffered']
    #allocation8 [shape = 'u8[512]{0}', space=vmem, size = 0x400, scoped, tag = 'input window, operand 8, single buffered']
    #allocation9 [shape = 's32[1]{0}', space=sflag, size = 0x4, scoped, tag = 'scoped memory for cnn3_forward.1']
    #allocation10 [shape = 'u8[512]{0}', space=vmem, size = 0x400, scoped, tag = 'input window, operand 10, single buffered']
    #allocation11 [shape = 'u8[1024]{0}', space=vmem, size = 0x400, scoped, tag = 'output window, operand 0, single buffered']
    %16 = vsyncpa [#allocation3], 0
    %17 = vsyncpa [#allocation6], 0
    %18 = vsyncpa [#allocation9], 0
    %19 = vsyncpa [#allocation4], 0
    // Predicated region
    $region2: #{cnn3_forward.1} parent=1 // pred_check
      _
    $region3: #{cnn3_forward.1} parent=1 // pred_check_branch
      %21 = sbr.rel (0) target = $region5
    $region4: #{cnn3_forward.1} parent=1 // pred_region
      _
    $region5: #{cnn3_forward.1} parent=1 // pred_fallthru
      _
    // Predicated region
    $region6: #{cnn3_forward.1} parent=1 // pred_check
      _
    $region7: #{cnn3_forward.1} parent=1 // pred_check_branch
      %23 = sbr.rel (0) target = $region9
    $region8: #{cnn3_forward.1} parent=1 // pred_region
      %s25 = ssub.s32 1024, 1024
      %26 = vsyncadd [#allocation3], %s25
      %s27 = sshll.u32 [#allocation2], 4
      %s28 = int_to_ptr.vmem [resolvable:$true] %s27
      %33 = dma.hbm_to_vmem [thread:$0]  %s1, 1024, %s28, [#allocation3], 128, 128, 8
    $region9: #{cnn3_forward.1} parent=1 // pred_fallthru
      _
    // Predicated region
    $region10: #{cnn3_forward.1} parent=1 // pred_check
      _
    $region11: #{cnn3_forward.1} parent=1 // pred_check_branch
      %35 = sbr.rel (0) target = $region13
    $region12: #{cnn3_forward.1} parent=1 // pred_region
      %s37 = ssub.s32 16, 16
      %38 = vsyncadd [#allocation6], %s37
      %s40 = sshll.u32 [#allocation5], 4
      %s41 = int_to_ptr.vmem [resolvable:$true] %s40
      %43 = dma.hbm_to_vmem [thread:$0]  %s2, 16, %s41, [#allocation6]
    $region13: #{cnn3_forward.1} parent=1 // pred_fallthru
      _
    // Predicated region
    $region14: #{cnn3_forward.1} parent=1 // pred_check
      _
    $region15: #{cnn3_forward.1} parent=1 // pred_check_branch
      %45 = sbr.rel (0) target = $region17
    $region16: #{cnn3_forward.1} parent=1 // pred_region
      %s47 = ssub.s32 1024, 1024
      %48 = vsyncadd [#allocation6], %s47
      %s49 = sshll.u32 [#allocation7], 4
      %s50 = int_to_ptr.vmem [resolvable:$true] %s49
      %55 = dma.hbm_to_vmem [thread:$0]  %s3, 1024, %s50, [#allocation6], 128, 128, 8
    $region17: #{cnn3_forward.1} parent=1 // pred_fallthru
      _
    // Predicated region
    $region18: #{cnn3_forward.1} parent=1 // pred_check
      _
    $region19: #{cnn3_forward.1} parent=1 // pred_check_branch
      %57 = sbr.rel (0) target = $region21
    $region20: #{cnn3_forward.1} parent=1 // pred_region
      _
    $region21: #{cnn3_forward.1} parent=1 // pred_fallthru
      _
    // Predicated region
    $region22: #{cnn3_forward.1} parent=1 // pred_check
      _
    $region23: #{cnn3_forward.1} parent=1 // pred_check_branch
      %59 = sbr.rel (0) target = $region25
    $region24: #{cnn3_forward.1} parent=1 // pred_region
      _
    $region25: #{cnn3_forward.1} parent=1 // pred_fallthru
      _
    // Predicated region
    $region26: #{cnn3_forward.1} parent=1 // pred_check
      _
    $region27: #{cnn3_forward.1} parent=1 // pred_check_branch
      %61 = sbr.rel (0) target = $region29
    $region28: #{cnn3_forward.1} parent=1 // pred_region
      _
    $region29: #{cnn3_forward.1} parent=1 // pred_fallthru
      _
    // Predicated region
    $region30: #{cnn3_forward.1} parent=1 // pred_check
      _
    $region31: #{cnn3_forward.1} parent=1 // pred_check_branch
      %63 = sbr.rel (0) target = $region33
    $region32: #{cnn3_forward.1} parent=1 // pred_region
      _
    $region33: #{cnn3_forward.1} parent=1 // pred_fallthru
      _
    // Predicated region
    $region34: #{cnn3_forward.1} parent=1 // pred_check
      _
    $region35: #{cnn3_forward.1} parent=1 // pred_check_branch
      %65 = sbr.rel (0) target = $region37
    $region36: #{cnn3_forward.1} parent=1 // pred_region
      %s67 = ssub.s32 16, 16
      %68 = vsyncadd [#allocation9], %s67
      %s70 = sshll.u32 [#allocation8], 4
      %s71 = int_to_ptr.vmem [resolvable:$true] %s70
      %73 = dma.hbm_to_vmem [thread:$0]  %s8, 16, %s71, [#allocation9]
    $region37: #{cnn3_forward.1} parent=1 // pred_fallthru
      _
    // Predicated region
    $region38: #{cnn3_forward.1} parent=1 // pred_check
      _
    $region39: #{cnn3_forward.1} parent=1 // pred_check_branch
      %75 = sbr.rel (0) target = $region41
    $region40: #{cnn3_forward.1} parent=1 // pred_region
      _
    $region41: #{cnn3_forward.1} parent=1 // pred_fallthru
      _
    // Predicated region
    $region42: #{cnn3_forward.1} parent=1 // pred_check
      _
    $region43: #{cnn3_forward.1} parent=1 // pred_check_branch
      %77 = sbr.rel (0) target = $region45
    $region44: #{cnn3_forward.1} parent=1 // pred_region
      %s79 = ssub.s32 16, 16
      %80 = vsyncadd [#allocation9], %s79
      %s82 = sshll.u32 [#allocation10], 4
      %s83 = int_to_ptr.vmem [resolvable:$true] %s82
      %85 = dma.hbm_to_vmem [thread:$0]  %s10, 16, %s83, [#allocation9]
    $region45: #{cnn3_forward.1} parent=1 // pred_fallthru
      _
    // Predicated region
    $region46: #{cnn3_forward.1} parent=1 // pred_check
      _
    $region47: #{cnn3_forward.1} parent=1 // pred_check_branch
      %87 = sbr.rel (0) target = $region49
    $region48: #{cnn3_forward.1} parent=1 // pred_region
      %88 = dma.done [#allocation3], 1024
    $region49: #{cnn3_forward.1} parent=1 // pred_fallthru
      _
    // Predicated region
    $region50: #{cnn3_forward.1} parent=1 // pred_check
      _
    $region51: #{cnn3_forward.1} parent=1 // pred_check_branch
      %90 = sbr.rel (0) target = $region53
    $region52: #{cnn3_forward.1} parent=1 // pred_region
      %91 = dma.done [#allocation6], 16
    $region53: #{cnn3_forward.1} parent=1 // pred_fallthru
      _
    // Predicated region
    $region54: #{cnn3_forward.1} parent=1 // pred_check
      _
    $region55: #{cnn3_forward.1} parent=1 // pred_check_branch
      %93 = sbr.rel (0) target = $region57
    $region56: #{cnn3_forward.1} parent=1 // pred_region
      %94 = dma.done [#allocation6], 1024
    $region57: #{cnn3_forward.1} parent=1 // pred_fallthru
      _
    // Predicated region
    $region58: #{cnn3_forward.1} parent=1 // pred_check
      _
    $region59: #{cnn3_forward.1} parent=1 // pred_check_branch
      %96 = sbr.rel (0) target = $region61
    $region60: #{cnn3_forward.1} parent=1 // pred_region
      %97 = dma.done [#allocation9], 16
    $region61: #{cnn3_forward.1} parent=1 // pred_fallthru
      _
    // Predicated region
    $region62: #{cnn3_forward.1} parent=1 // pred_check
      _
    $region63: #{cnn3_forward.1} parent=1 // pred_check_branch
      %99 = sbr.rel (0) target = $region65
    $region64: #{cnn3_forward.1} parent=1 // pred_region
      %100 = dma.done [#allocation9], 16
    $region65: #{cnn3_forward.1} parent=1 // pred_fallthru
      _
    %v101 = vld [vmem:[%s0] sm:$0x3]
    %v102 = vld [vmem:[#allocation2] sm:$0xff]
    %v103 = vld [vmem:[#allocation2 + $0x8] sm:$0xff]
    %v104 = vld [vmem:[#allocation2 + $0x10] sm:$0xff]
    %v105 = vld [vmem:[#allocation2 + $0x18] sm:$0xff]
    %v106 = vld [vmem:[#allocation2 + $0x20] sm:$0xff]
    %v107 = vld [vmem:[#allocation2 + $0x28] sm:$0xff]
    %v108 = vld [vmem:[#allocation2 + $0x30] sm:$0xff]
    %v109 = vld [vmem:[#allocation2 + $0x38] sm:$0xff]
    %vm110 = vcmask 523264
    %v112 = vsel %vm110, %v101, 0
    %114 = vmatprep.subr.mxu0 0.0
    %115 = vmatpush1.msra.mxu0 %v102
    %116 = vmatprep.subr.mxu0 0.0
    %117 = vmatpush1.msra.mxu0 %v103
    %118 = vmatprep.subr.mxu0 0.0
    %119 = vmatpush1.msra.mxu0 %v104
    %120 = vmatprep.subr.mxu0 0.0
    %121 = vmatpush1.msra.mxu0 %v105
    %122 = vmatprep.subr.mxu0 0.0
    %123 = vmatpush1.msra.mxu0 %v106
    %124 = vmatprep.subr.mxu0 0.0
    %125 = vmatpush1.msra.mxu0 %v107
    %126 = vmatprep.subr.mxu0 0.0
    %127 = vmatpush1.msra.mxu0 %v108
    %128 = vmatprep.subr.mxu0 0.0
    %129 = vmatpush1.msra.mxu0 %v109
    %130 = vmatprep.subr.mxu0 0.0
    %131 = vmatpush1.msra.mxu0 0.0
    %132 = vmatprep.subr.mxu0 0.0
    %133 = vmatpush1.msra.mxu0 0.0
    %134 = vmatprep.subr.mxu0 0.0
    %135 = vmatpush1.msra.mxu0 0.0
    %136 = vmatprep.subr.mxu0 0.0
    %137 = vmatpush1.msra.mxu0 0.0
    %138 = vmatprep.subr.mxu0 0.0
    %139 = vmatpush1.msra.mxu0 0.0
    %140 = vmatprep.subr.mxu0 0.0
    %141 = vmatpush1.msra.mxu0 0.0
    %142 = vmatprep.subr.mxu0 0.0
    %143 = vmatpush1.msra.mxu0 0.0
    %144 = vmatprep.subr.mxu0 0.0
    %145 = vmatpush1.msra.mxu0 0.0
    %146 = vmatprep.subr.mxu0 0.0
    %147 = vmatpush1.msra.mxu0 0.0
    %148 = vmatprep.subr.mxu0 0.0
    %149 = vmatpush1.msra.mxu0 0.0
    %150 = vmatprep.subr.mxu0 0.0
    %151 = vmatpush1.msra.mxu0 0.0
    %152 = vmatprep.subr.mxu0 0.0
    %153 = vmatpush1.msra.mxu0 0.0
    %154 = vmatprep.subr.mxu0 0.0
    %155 = vmatpush1.msra.mxu0 0.0
    %156 = vmatprep.subr.mxu0 0.0
    %157 = vmatpush1.msra.mxu0 0.0
    %158 = vmatprep.subr.mxu0 0.0
    %159 = vmatpush1.msra.mxu0 0.0
    %160 = vmatprep.subr.mxu0 0.0
    %161 = vmatpush1.msra.mxu0 0.0
    %162 = vmatprep.subr.mxu0 0.0
    %163 = vmatpush1.msra.mxu0 0.0
    %164 = vmatprep.subr.mxu0 0.0
    %165 = vmatpush1.msra.mxu0 0.0
    %166 = vmatprep.subr.mxu0 0.0
    %167 = vmatpush1.msra.mxu0 0.0
    %168 = vmatprep.subr.mxu0 0.0
    %169 = vmatpush1.msra.mxu0 0.0
    %170 = vmatprep.subr.mxu0 0.0
    %171 = vmatpush1.msra.mxu0 0.0
    %172 = vmatprep.subr.mxu0 0.0
    %173 = vmatpush1.msra.mxu0 0.0
    %174 = vmatprep.subr.mxu0 0.0
    %175 = vmatpush1.msra.mxu0 0.0
    %176 = vmatprep.subr.mxu0 0.0
    %177 = vmatpush1.msra.mxu0 0.0
    %178 = vmatprep.mubr.f32.mxu0 0.0
    %179 = vmatmul.mubr.f32.gmra.mrb[0].mxu0 %v112
    %v180 = vpop.f32.mrb[0].mxu0
    %v181 = vadd.f32 0.0, %v180
    %v182 = vpop.f32.mrb[0].mxu0
    %183 = vdwg.mxu0
    %185 = vrot.lane.b32.xlu0 %v181, 64
    %v186 = vpop.permute.xlu0 %185
    %v188 = vmax.f32 %v181, %v186
    %v189 = vld [vmem:[#allocation5] sm:$0x1]
    %v191 = vlaneseq
    %v192 = vshrl.u32 %v191, 7
    %v193 = vsub.s32 0, %v192
    %v194 = vrot.slane %v189, %v193
    %v196 = vadd.f32 %v188, %v194
    %vm197 = vcmp.ge.f32.partialorder %v196, 0.0
    %v198 = vmul.f32 %v196, 0.01
    %v199 = vsel %vm197, %v196, %v198
    %v200 = vld [vmem:[#allocation7] sm:$0xff]
    %v201 = vld [vmem:[#allocation7 + $0x8] sm:$0xff]
    %v202 = vld [vmem:[#allocation7 + $0x10] sm:$0xff]
    %v203 = vld [vmem:[#allocation7 + $0x18] sm:$0xff]
    %v204 = vld [vmem:[#allocation7 + $0x20] sm:$0xff]
    %v205 = vld [vmem:[#allocation7 + $0x28] sm:$0xff]
    %v206 = vld [vmem:[#allocation7 + $0x30] sm:$0xff]
    %v207 = vld [vmem:[#allocation7 + $0x38] sm:$0xff]
    %v209 = vsel %vm110, %v199, 0
    %211 = vmatprep.subr.mxu0 0.0
    %212 = vmatpush1.msra.mxu0 %v200
    %213 = vmatprep.subr.mxu0 0.0
    %214 = vmatpush1.msra.mxu0 %v201
    %215 = vmatprep.subr.mxu0 0.0
    %216 = vmatpush1.msra.mxu0 %v202
    %217 = vmatprep.subr.mxu0 0.0
    %218 = vmatpush1.msra.mxu0 %v203
    %219 = vmatprep.subr.mxu0 0.0
    %220 = vmatpush1.msra.mxu0 %v204
    %221 = vmatprep.subr.mxu0 0.0
    %222 = vmatpush1.msra.mxu0 %v205
    %223 = vmatprep.subr.mxu0 0.0
    %224 = vmatpush1.msra.mxu0 %v206
    %225 = vmatprep.subr.mxu0 0.0
    %226 = vmatpush1.msra.mxu0 %v207
    %227 = vmatprep.subr.mxu0 0.0
    %228 = vmatpush1.msra.mxu0 0.0
    %229 = vmatprep.subr.mxu0 0.0
    %230 = vmatpush1.msra.mxu0 0.0
    %231 = vmatprep.subr.mxu0 0.0
    %232 = vmatpush1.msra.mxu0 0.0
    %233 = vmatprep.subr.mxu0 0.0
    %234 = vmatpush1.msra.mxu0 0.0
    %235 = vmatprep.subr.mxu0 0.0
    %236 = vmatpush1.msra.mxu0 0.0
    %237 = vmatprep.subr.mxu0 0.0
    %238 = vmatpush1.msra.mxu0 0.0
    %239 = vmatprep.subr.mxu0 0.0
    %240 = vmatpush1.msra.mxu0 0.0
    %241 = vmatprep.subr.mxu0 0.0
    %242 = vmatpush1.msra.mxu0 0.0
    %243 = vmatprep.subr.mxu0 0.0
    %244 = vmatpush1.msra.mxu0 0.0
    %245 = vmatprep.subr.mxu0 0.0
    %246 = vmatpush1.msra.mxu0 0.0
    %247 = vmatprep.subr.mxu0 0.0
    %248 = vmatpush1.msra.mxu0 0.0
    %249 = vmatprep.subr.mxu0 0.0
    %250 = vmatpush1.msra.mxu0 0.0
    %251 = vmatprep.subr.mxu0 0.0
    %252 = vmatpush1.msra.mxu0 0.0
    %253 = vmatprep.subr.mxu0 0.0
    %254 = vmatpush1.msra.mxu0 0.0
    %255 = vmatprep.subr.mxu0 0.0
    %256 = vmatpush1.msra.mxu0 0.0
    %257 = vmatprep.subr.mxu0 0.0
    %258 = vmatpush1.msra.mxu0 0.0
    %259 = vmatprep.subr.mxu0 0.0
    %260 = vmatpush1.msra.mxu0 0.0
    %261 = vmatprep.subr.mxu0 0.0
    %262 = vmatpush1.msra.mxu0 0.0
    %263 = vmatprep.subr.mxu0 0.0
    %264 = vmatpush1.msra.mxu0 0.0
    %265 = vmatprep.subr.mxu0 0.0
    %266 = vmatpush1.msra.mxu0 0.0
    %267 = vmatprep.subr.mxu0 0.0
    %268 = vmatpush1.msra.mxu0 0.0
    %269 = vmatprep.subr.mxu0 0.0
    %270 = vmatpush1.msra.mxu0 0.0
    %271 = vmatprep.subr.mxu0 0.0
    %272 = vmatpush1.msra.mxu0 0.0
    %273 = vmatprep.subr.mxu0 0.0
    %274 = vmatpush1.msra.mxu0 0.0
    %275 = vmatprep.mubr.f32.mxu0 0.0
    %276 = vmatmul.mubr.f32.gmra.mrb[0].mxu0 %v209
    %v277 = vpop.f32.mrb[0].mxu0
    %v278 = vadd.f32 0.0, %v277
    %v279 = vpop.f32.mrb[0].mxu0
    %280 = vdwg.mxu0
    %282 = vrot.lane.b32.xlu0 %v278, 96
    %v283 = vpop.permute.xlu0 %282
    %v285 = vmax.f32 %v278, %v283
    %v286 = vld [vmem:[%s4] sm:$0x1]
    %v288 = vlaneseq
    %v289 = vshrl.u32 %v288, 7
    %v290 = vsub.s32 0, %v289
    %v291 = vrot.slane %v286, %v290
    %v293 = vadd.f32 %v285, %v291
    %vm294 = vcmp.ge.f32.partialorder %v293, 0.0
    %v295 = vmul.f32 %v293, 0.01
    %v296 = vsel %vm294, %v293, %v295
    %v297 = vld [vmem:[%s5] sm:$0xff]
    %v298 = vld [vmem:[%s5 + $0x8] sm:$0xff]
    %v299 = vld [vmem:[%s5 + $0x10] sm:$0xff]
    %v300 = vld [vmem:[%s5 + $0x18] sm:$0xff]
    %v301 = vld [vmem:[%s6] sm:$0x1]
    %v303 = vlaneseq
    %v304 = vshrl.u32 %v303, 7
    %v305 = vsub.s32 0, %v304
    %v306 = vrot.slane %v301, %v305
    %vm308 = vcmask 261120
    %v310 = vsel %vm308, %v296, 0
    %312 = vmatprep.subr.mxu0 0.0
    %313 = vmatpush1.msra.mxu0 %v297
    %314 = vmatprep.subr.mxu0 0.0
    %315 = vmatpush1.msra.mxu0 %v298
    %316 = vmatprep.subr.mxu0 0.0
    %317 = vmatpush1.msra.mxu0 %v299
    %318 = vmatprep.subr.mxu0 0.0
    %319 = vmatpush1.msra.mxu0 %v300
    %320 = vmatprep.subr.mxu0 0.0
    %321 = vmatpush1.msra.mxu0 0.0
    %322 = vmatprep.subr.mxu0 0.0
    %323 = vmatpush1.msra.mxu0 0.0
    %324 = vmatprep.subr.mxu0 0.0
    %325 = vmatpush1.msra.mxu0 0.0
    %326 = vmatprep.subr.mxu0 0.0
    %327 = vmatpush1.msra.mxu0 0.0
    %328 = vmatprep.subr.mxu0 0.0
    %329 = vmatpush1.msra.mxu0 0.0
    %330 = vmatprep.subr.mxu0 0.0
    %331 = vmatpush1.msra.mxu0 0.0
    %332 = vmatprep.subr.mxu0 0.0
    %333 = vmatpush1.msra.mxu0 0.0
    %334 = vmatprep.subr.mxu0 0.0
    %335 = vmatpush1.msra.mxu0 0.0
    %336 = vmatprep.subr.mxu0 0.0
    %337 = vmatpush1.msra.mxu0 0.0
    %338 = vmatprep.subr.mxu0 0.0
    %339 = vmatpush1.msra.mxu0 0.0
    %340 = vmatprep.subr.mxu0 0.0
    %341 = vmatpush1.msra.mxu0 0.0
    %342 = vmatprep.subr.mxu0 0.0
    %343 = vmatpush1.msra.mxu0 0.0
    %344 = vmatprep.subr.mxu0 0.0
    %345 = vmatpush1.msra.mxu0 0.0
    %346 = vmatprep.subr.mxu0 0.0
    %347 = vmatpush1.msra.mxu0 0.0
    %348 = vmatprep.subr.mxu0 0.0
    %349 = vmatpush1.msra.mxu0 0.0
    %350 = vmatprep.subr.mxu0 0.0
    %351 = vmatpush1.msra.mxu0 0.0
    %352 = vmatprep.subr.mxu0 0.0
    %353 = vmatpush1.msra.mxu0 0.0
    %354 = vmatprep.subr.mxu0 0.0
    %355 = vmatpush1.msra.mxu0 0.0
    %356 = vmatprep.subr.mxu0 0.0
    %357 = vmatpush1.msra.mxu0 0.0
    %358 = vmatprep.subr.mxu0 0.0
    %359 = vmatpush1.msra.mxu0 0.0
    %360 = vmatprep.subr.mxu0 0.0
    %361 = vmatpush1.msra.mxu0 0.0
    %362 = vmatprep.subr.mxu0 0.0
    %363 = vmatpush1.msra.mxu0 0.0
    %364 = vmatprep.subr.mxu0 0.0
    %365 = vmatpush1.msra.mxu0 0.0
    %366 = vmatprep.subr.mxu0 0.0
    %367 = vmatpush1.msra.mxu0 0.0
    %368 = vmatprep.subr.mxu0 0.0
    %369 = vmatpush1.msra.mxu0 0.0
    %370 = vmatprep.subr.mxu0 0.0
    %371 = vmatpush1.msra.mxu0 0.0
    %372 = vmatprep.subr.mxu0 0.0
    %373 = vmatpush1.msra.mxu0 0.0
    %374 = vmatprep.subr.mxu0 0.0
    %375 = vmatpush1.msra.mxu0 0.0
    %376 = vmatprep.mubr.f32.mxu0 0.0
    %377 = vmatmul.mubr.f32.gmra.mrb[0].mxu0 %v310
    %v378 = vpop.f32.mrb[0].mxu0
    %v379 = vadd.f32 %v306, %v378
    %v380 = vpop.f32.mrb[0].mxu0
    %381 = vdwg.mxu0
    %vm382 = vcmp.ge.f32.partialorder %v379, 0.0
    %v383 = vmul.f32 %v379, 0.01
    %v384 = vsel %vm382, %v379, %v383
    %v385 = vld [vmem:[%s7] sm:$0xff]
    %v386 = vld [vmem:[%s7 + $0x8] sm:$0xff]
    %v387 = vld [vmem:[%s7 + $0x10] sm:$0xff]
    %v388 = vld [vmem:[%s7 + $0x18] sm:$0xff]
    %v389 = vld [vmem:[#allocation8] sm:$0x1]
    %v391 = vlaneseq
    %v392 = vshrl.u32 %v391, 7
    %v393 = vsub.s32 0, %v392
    %v394 = vrot.slane %v389, %v393
    %v397 = vsel %vm308, %v384, 0
    %399 = vmatprep.subr.mxu0 0.0
    %400 = vmatpush1.msra.mxu0 %v385
    %401 = vmatprep.subr.mxu0 0.0
    %402 = vmatpush1.msra.mxu0 %v386
    %403 = vmatprep.subr.mxu0 0.0
    %404 = vmatpush1.msra.mxu0 %v387
    %405 = vmatprep.subr.mxu0 0.0
    %406 = vmatpush1.msra.mxu0 %v388
    %407 = vmatprep.subr.mxu0 0.0
    %408 = vmatpush1.msra.mxu0 0.0
    %409 = vmatprep.subr.mxu0 0.0
    %410 = vmatpush1.msra.mxu0 0.0
    %411 = vmatprep.subr.mxu0 0.0
    %412 = vmatpush1.msra.mxu0 0.0
    %413 = vmatprep.subr.mxu0 0.0
    %414 = vmatpush1.msra.mxu0 0.0
    %415 = vmatprep.subr.mxu0 0.0
    %416 = vmatpush1.msra.mxu0 0.0
    %417 = vmatprep.subr.mxu0 0.0
    %418 = vmatpush1.msra.mxu0 0.0
    %419 = vmatprep.subr.mxu0 0.0
    %420 = vmatpush1.msra.mxu0 0.0
    %421 = vmatprep.subr.mxu0 0.0
    %422 = vmatpush1.msra.mxu0 0.0
    %423 = vmatprep.subr.mxu0 0.0
    %424 = vmatpush1.msra.mxu0 0.0
    %425 = vmatprep.subr.mxu0 0.0
    %426 = vmatpush1.msra.mxu0 0.0
    %427 = vmatprep.subr.mxu0 0.0
    %428 = vmatpush1.msra.mxu0 0.0
    %429 = vmatprep.subr.mxu0 0.0
    %430 = vmatpush1.msra.mxu0 0.0
    %431 = vmatprep.subr.mxu0 0.0
    %432 = vmatpush1.msra.mxu0 0.0
    %433 = vmatprep.subr.mxu0 0.0
    %434 = vmatpush1.msra.mxu0 0.0
    %435 = vmatprep.subr.mxu0 0.0
    %436 = vmatpush1.msra.mxu0 0.0
    %437 = vmatprep.subr.mxu0 0.0
    %438 = vmatpush1.msra.mxu0 0.0
    %439 = vmatprep.subr.mxu0 0.0
    %440 = vmatpush1.msra.mxu0 0.0
    %441 = vmatprep.subr.mxu0 0.0
    %442 = vmatpush1.msra.mxu0 0.0
    %443 = vmatprep.subr.mxu0 0.0
    %444 = vmatpush1.msra.mxu0 0.0
    %445 = vmatprep.subr.mxu0 0.0
    %446 = vmatpush1.msra.mxu0 0.0
    %447 = vmatprep.subr.mxu0 0.0
    %448 = vmatpush1.msra.mxu0 0.0
    %449 = vmatprep.subr.mxu0 0.0
    %450 = vmatpush1.msra.mxu0 0.0
    %451 = vmatprep.subr.mxu0 0.0
    %452 = vmatpush1.msra.mxu0 0.0
    %453 = vmatprep.subr.mxu0 0.0
    %454 = vmatpush1.msra.mxu0 0.0
    %455 = vmatprep.subr.mxu0 0.0
    %456 = vmatpush1.msra.mxu0 0.0
    %457 = vmatprep.subr.mxu0 0.0
    %458 = vmatpush1.msra.mxu0 0.0
    %459 = vmatprep.subr.mxu0 0.0
    %460 = vmatpush1.msra.mxu0 0.0
    %461 = vmatprep.subr.mxu0 0.0
    %462 = vmatpush1.msra.mxu0 0.0
    %463 = vmatprep.mubr.f32.mxu0 0.0
    %464 = vmatmul.mubr.f32.gmra.mrb[0].mxu0 %v397
    %v465 = vpop.f32.mrb[0].mxu0
    %v466 = vadd.f32 %v394, %v465
    %v467 = vpop.f32.mrb[0].mxu0
    %468 = vdwg.mxu0
    %v469 = vld [vmem:[%s9] sm:$0xff]
    %v470 = vld [vmem:[%s9 + $0x8] sm:$0xff]
    %v471 = vld [vmem:[%s9 + $0x10] sm:$0xff]
    %v472 = vld [vmem:[%s9 + $0x18] sm:$0xff]
    %v473 = vld [vmem:[#allocation10] sm:$0x1]
    %v475 = vlaneseq
    %v476 = vshrl.u32 %v475, 7
    %v477 = vsub.s32 0, %v476
    %v478 = vrot.slane %v473, %v477
    %v481 = vsel %vm308, %v466, 0
    %483 = vmatprep.subr.mxu0 0.0
    %484 = vmatpush1.msra.mxu0 %v469
    %485 = vmatprep.subr.mxu0 0.0
    %486 = vmatpush1.msra.mxu0 %v470
    %487 = vmatprep.subr.mxu0 0.0
    %488 = vmatpush1.msra.mxu0 %v471
    %489 = vmatprep.subr.mxu0 0.0
    %490 = vmatpush1.msra.mxu0 %v472
    %491 = vmatprep.subr.mxu0 0.0
    %492 = vmatpush1.msra.mxu0 0.0
    %493 = vmatprep.subr.mxu0 0.0
    %494 = vmatpush1.msra.mxu0 0.0
    %495 = vmatprep.subr.mxu0 0.0
    %496 = vmatpush1.msra.mxu0 0.0
    %497 = vmatprep.subr.mxu0 0.0
    %498 = vmatpush1.msra.mxu0 0.0
    %499 = vmatprep.subr.mxu0 0.0
    %500 = vmatpush1.msra.mxu0 0.0
    %501 = vmatprep.subr.mxu0 0.0
    %502 = vmatpush1.msra.mxu0 0.0
    %503 = vmatprep.subr.mxu0 0.0
    %504 = vmatpush1.msra.mxu0 0.0
    %505 = vmatprep.subr.mxu0 0.0
    %506 = vmatpush1.msra.mxu0 0.0
    %507 = vmatprep.subr.mxu0 0.0
    %508 = vmatpush1.msra.mxu0 0.0
    %509 = vmatprep.subr.mxu0 0.0
    %510 = vmatpush1.msra.mxu0 0.0
    %511 = vmatprep.subr.mxu0 0.0
    %512 = vmatpush1.msra.mxu0 0.0
    %513 = vmatprep.subr.mxu0 0.0
    %514 = vmatpush1.msra.mxu0 0.0
    %515 = vmatprep.subr.mxu0 0.0
    %516 = vmatpush1.msra.mxu0 0.0
    %517 = vmatprep.subr.mxu0 0.0
    %518 = vmatpush1.msra.mxu0 0.0
    %519 = vmatprep.subr.mxu0 0.0
    %520 = vmatpush1.msra.mxu0 0.0
    %521 = vmatprep.subr.mxu0 0.0
    %522 = vmatpush1.msra.mxu0 0.0
    %523 = vmatprep.subr.mxu0 0.0
    %524 = vmatpush1.msra.mxu0 0.0
    %525 = vmatprep.subr.mxu0 0.0
    %526 = vmatpush1.msra.mxu0 0.0
    %527 = vmatprep.subr.mxu0 0.0
    %528 = vmatpush1.msra.mxu0 0.0
    %529 = vmatprep.subr.mxu0 0.0
    %530 = vmatpush1.msra.mxu0 0.0
    %531 = vmatprep.subr.mxu0 0.0
    %532 = vmatpush1.msra.mxu0 0.0
    %533 = vmatprep.subr.mxu0 0.0
    %534 = vmatpush1.msra.mxu0 0.0
    %535 = vmatprep.subr.mxu0 0.0
    %536 = vmatpush1.msra.mxu0 0.0
    %537 = vmatprep.subr.mxu0 0.0
    %538 = vmatpush1.msra.mxu0 0.0
    %539 = vmatprep.subr.mxu0 0.0
    %540 = vmatpush1.msra.mxu0 0.0
    %541 = vmatprep.subr.mxu0 0.0
    %542 = vmatpush1.msra.mxu0 0.0
    %543 = vmatprep.subr.mxu0 0.0
    %544 = vmatpush1.msra.mxu0 0.0
    %545 = vmatprep.subr.mxu0 0.0
    %546 = vmatpush1.msra.mxu0 0.0
    %547 = vmatprep.mubr.f32.mxu0 0.0
    %548 = vmatmul.mubr.f32.gmra.mrb[0].mxu0 %v481
    %v549 = vpop.f32.mrb[0].mxu0
    %v550 = vadd.f32 %v478, %v549
    %v551 = vpop.f32.mrb[0].mxu0
    %552 = vdwg.mxu0
    %vm553 = vcmask 17408
    %554 = vst.msk [vmem:[#allocation11] sm:$0x3] %vm553, %v550
    // Predicated region
    $region66: #{cnn3_forward.1} parent=1 // pred_check
      _
    $region67: #{cnn3_forward.1} parent=1 // pred_check_branch
      %556 = sbr.rel (0) target = $region69
    $region68: #{cnn3_forward.1} parent=1 // pred_region
      %s558 = ssub.s32 32, 32
      %559 = vsyncadd [#allocation4], %s558
      %s561 = sshll.u32 [#allocation11], 4
      %s562 = int_to_ptr.vmem [resolvable:$true] %s561
      %564 = dma.vmem_to_hbm [thread:$0]  %s562, 32, %s11, [#allocation4]
    $region69: #{cnn3_forward.1} parent=1 // pred_fallthru
      _
    // Predicated region
    $region70: #{cnn3_forward.1} parent=1 // pred_check
      _
    $region71: #{cnn3_forward.1} parent=1 // pred_check_branch
      %566 = sbr.rel (0) target = $region73
    $region72: #{cnn3_forward.1} parent=1 // pred_region
      %567 = dma.done [#allocation4], 32
    $region73: #{cnn3_forward.1} parent=1 // pred_fallthru
      _
    %568 = vsyncpa [#allocation3], 1
    %569 = vsyncpa [#allocation6], 1
    %570 = vsyncpa [#allocation9], 1
    %571 = vsyncpa [#allocation4], 1

</llo_original>
